<compile_context>
chip_gen: v6e
topology: v6e:2x2x1
jax: 0.10.0
libtpu: 0.0.40
codegen_flags: <defaults>
</compile_context>

<pallas_src>
import jax
import jax.numpy as jnp
from jax.experimental import pallas as pl
from jax.experimental.pallas import tpu as pltpu


def fused_conv_gelu_kernel(x_ref, wt_ref, b_ref, o_ref):
    # x_ref: (1, Cin, TM)   wt_ref: (Cout, Cin)   b_ref: (Cout, 1)   o_ref: (1, Cout, TM)
    x = x_ref[0]                                   # (Cin, TM)  channels-major tile
    wt = wt_ref[...]                               # (Cout, Cin) fused weight (transposed)
    b = b_ref[...]                                 # (Cout, 1)  fused bias
    v2 = jnp.dot(wt, x, preferred_element_type=jnp.float32) + b   # (Cout, TM)
    # exact-erf GELU: 0.5 * v2 * (1 + erf(v2 / sqrt(2)))
    v3 = v2 * 0.5
    v5 = jax.lax.erf(v2 * 0.7071067811865476)
    o_ref[0] = (v3 * (v5 + 1.0)).astype(o_ref.dtype)


def model_forward(x_nchw, w1, b1, w2, b2):
    """x_nchw: (N, Cin, H, W) float32.  Returns (N, Cout, H, W) float32.

    w1: (Cin, Cmid), b1: (Cmid,)  -- conv1 (1x1) as a channel-mix matrix
    w2: (Cmid, Cout), b2: (Cout,) -- conv2 (1x1) as a channel-mix matrix
    """
    N, Cin, H, W = x_nchw.shape
    Cout = w2.shape[1]
    HW = H * W

    # Algebraic fusion of the two pointwise convs (no nonlinearity in between).
    wt = jnp.transpose(w1 @ w2)                    # (Cout, Cin)
    bias = (b1 @ w2 + b2).reshape(Cout, 1)         # (Cout, 1)

    # Channels-major view: no NCHW<->NHWC transposes, just a reshape.
    x3 = x_nchw.reshape(N, Cin, HW)

    # Pixel tile: full spatial extent when small, otherwise a 128-aligned tile.
    TM = HW if HW <= 2048 else 2048
    grid = (N, pl.cdiv(HW, TM))

    cost = pl.CostEstimate(
        flops=2 * N * HW * Cin * Cout,
        transcendentals=N * HW * Cout,
        bytes_accessed=4 * N * HW * (Cin + Cout),
    )

    out3 = pl.pallas_call(
        fused_conv_gelu_kernel,
        out_shape=jax.ShapeDtypeStruct((N, Cout, HW), jnp.float32),
        grid=grid,
        in_specs=[
            # x tile: one image, all channels, TM pixels
            pl.BlockSpec((1, Cin, TM), lambda n, i: (n, 0, i)),
            # fused weight / bias: resident, DMA'd once (constant index_map)
            pl.BlockSpec((Cout, Cin), lambda n, i: (0, 0)),
            pl.BlockSpec((Cout, 1), lambda n, i: (0, 0)),
        ],
        out_specs=pl.BlockSpec((1, Cout, TM), lambda n, i: (n, 0, i)),
        compiler_params=pltpu.CompilerParams(
            dimension_semantics=("parallel", "parallel"),
        ),
        cost_estimate=cost,
    )(x3, wt, bias)

    return out3.reshape(N, Cout, H, W)


if __name__ == "__main__":
    key = jax.random.PRNGKey(0)
    k_x, k_w1, k_b1, k_w2, k_b2 = jax.random.split(key, 5)

    # Small shapes consistent with the module: Cin=3 -> Cmid=3 -> Cout=32.
    N, Cin, H, W = 2, 3, 16, 16
    Cmid, Cout = 3, 32

    x = jax.random.normal(k_x, (N, Cin, H, W), dtype=jnp.float32)

    # Deterministic parameter init (1x1 conv weights as (Cin, Cout) matrices).
    bound1 = 1.0 / jnp.sqrt(Cin * 1 * 1)
    w1 = jax.random.uniform(k_w1, (Cin, Cmid), minval=-bound1, maxval=bound1, dtype=jnp.float32)
    b1 = jax.random.uniform(k_b1, (Cmid,), minval=-bound1, maxval=bound1, dtype=jnp.float32)
    bound2 = 1.0 / jnp.sqrt(Cmid * 1 * 1)
    w2 = jax.random.uniform(k_w2, (Cmid, Cout), minval=-bound2, maxval=bound2, dtype=jnp.float32)
    b2 = jax.random.uniform(k_b2, (Cout,), minval=-bound2, maxval=bound2, dtype=jnp.float32)

    out = model_forward(x, w1, b1, w2, b2)
    jax.block_until_ready(out)

    # Reference in plain JAX (unfused math, channels-major, same semantics).
    x3 = x.reshape(N, Cin, H * W)
    h = jnp.einsum("ncm,cd->ndm", x3, w1) + b1[None, :, None]
    v2 = jnp.einsum("ndm,de->nem", h, w2) + b2[None, :, None]
    ref = (0.5 * v2 * (jax.lax.erf(v2 * 0.7071067811865476) + 1.0)).reshape(N, Cout, H, W)

    assert out.shape == (N, Cout, H, W)
    assert jnp.allclose(out, ref, atol=1e-5, rtol=1e-5)

    print("KERNEL_OK")
</pallas_src>

<mosaic_0001>
module attributes {stable_mosaic.version = 11 : i64} {
  func.func @fused_conv_gelu_kernel(%arg0: i32, %arg1: i32, %arg2: memref<1x3x256xf32, #tpu.memory_space<vmem>>, %arg3: memref<32x3xf32, #tpu.memory_space<vmem>>, %arg4: memref<32x1xf32, #tpu.memory_space<vmem>>, %arg5: memref<1x32x256xf32, #tpu.memory_space<vmem>>) attributes {dimension_semantics = [#tpu.dimension_semantics<parallel>, #tpu.dimension_semantics<parallel>], iteration_bounds = array<i64: 2, 1>, scalar_prefetch = 0 : i64, scratch_operands = 0 : i64, tpu.core_type = #tpu.core_type<tc>, window_params = [{transform_indices = @transform_0, window_bounds = array<i64: 1, 3, 256>}, {pipeline_mode = #tpu.pipeline_mode<synchronous>, transform_indices = @transform_1, window_bounds = array<i64: 32, 3>}, {pipeline_mode = #tpu.pipeline_mode<synchronous>, transform_indices = @transform_2, window_bounds = array<i64: 32, 1>}, {transform_indices = @transform_3, window_bounds = array<i64: 1, 32, 256>}]} {
    %c0 = arith.constant 0 : index
    %c0_0 = arith.constant 0 : index
    %c0_1 = arith.constant 0 : index
    %0 = vector.load %arg2[%c0, %c0_0, %c0_1] : memref<1x3x256xf32, #tpu.memory_space<vmem>>, vector<1x3x256xf32>
    %1 = vector.shape_cast %0 : vector<1x3x256xf32> to vector<3x256xf32>
    %c0_2 = arith.constant 0 : index
    %c0_3 = arith.constant 0 : index
    %2 = vector.load %arg3[%c0_2, %c0_3] : memref<32x3xf32, #tpu.memory_space<vmem>>, vector<32x3xf32>
    %c0_4 = arith.constant 0 : index
    %c0_5 = arith.constant 0 : index
    %3 = vector.load %arg4[%c0_4, %c0_5] : memref<32x1xf32, #tpu.memory_space<vmem>>, vector<32x1xf32>
    %cst = arith.constant dense<0.000000e+00> : vector<32x256xf32>
    %4 = tpu.matmul %2, %1, %cst {dimension_numbers = #tpu.dot_dimension_numbers<[1], [0], [0], [1], [0, 0, 1, 1], [], []>} : vector<32x3xf32>, vector<3x256xf32>, vector<32x256xf32> -> vector<32x256xf32>
    %5 = vector.broadcast %3 : vector<32x1xf32> to vector<32x256xf32>
    %6 = arith.addf %4, %5 : vector<32x256xf32>
    %cst_6 = arith.constant 5.000000e-01 : f32
    %7 = vector.broadcast %cst_6 : f32 to vector<32x256xf32>
    %8 = arith.mulf %6, %7 : vector<32x256xf32>
    %cst_7 = arith.constant 0.707106769 : f32
    %9 = vector.broadcast %cst_7 : f32 to vector<32x256xf32>
    %10 = arith.mulf %6, %9 : vector<32x256xf32>
    %11 = math.erf %10 : vector<32x256xf32>
    %cst_8 = arith.constant 1.000000e+00 : f32
    %12 = vector.broadcast %cst_8 : f32 to vector<32x256xf32>
    %13 = arith.addf %11, %12 : vector<32x256xf32>
    %14 = arith.mulf %8, %13 : vector<32x256xf32>
    %c0_9 = arith.constant 0 : index
    %c0_10 = arith.constant 0 : index
    %c0_11 = arith.constant 0 : index
    %15 = vector.load %arg5[%c0_9, %c0_10, %c0_11] : memref<1x32x256xf32, #tpu.memory_space<vmem>>, vector<1x32x256xf32>
    %16 = vector.shape_cast %15 : vector<1x32x256xf32> to vector<32x256xf32>
    %17 = vector.shape_cast %14 : vector<32x256xf32> to vector<1x32x256xf32>
    tpu.vector_store %arg5[%c0_9, %c0_10, %c0_11], %17 {strides = array<i32>} : memref<1x32x256xf32, #tpu.memory_space<vmem>>, vector<1x32x256xf32>,
    return
  }
  func.func @transform_0(%arg0: i32, %arg1: i32) -> (i32, i32, i32) {
    %c0_i32 = arith.constant 0 : i32
    %c0_i32_0 = arith.constant 0 : i32
    return %arg0, %c0_i32, %arg1 : i32, i32, i32
  }
  func.func @transform_1(%arg0: i32, %arg1: i32) -> (i32, i32) {
    %c0_i32 = arith.constant 0 : i32
    %c0_i32_0 = arith.constant 0 : i32
    %c0_i32_1 = arith.constant 0 : i32
    return %c0_i32, %c0_i32_0 : i32, i32
  }
  func.func @transform_2(%arg0: i32, %arg1: i32) -> (i32, i32) {
    %c0_i32 = arith.constant 0 : i32
    %c0_i32_0 = arith.constant 0 : i32
    %c0_i32_1 = arith.constant 0 : i32
    return %c0_i32, %c0_i32_0 : i32, i32
  }
  func.func @transform_3(%arg0: i32, %arg1: i32) -> (i32, i32, i32) {
    %c0_i32 = arith.constant 0 : i32
    %c0_i32_0 = arith.constant 0 : i32
    return %arg0, %c0_i32, %arg1 : i32, i32, i32
  }
}

</mosaic_0001>

<llo_original>
// kernel: tpu_custom_call.1
$region0: #{tpu_custom_call.1}
  #allocation0 [shape = 'u32[]', space=smem, size = 0x4, offset = 0x4, fixed_abs, tag = 'smem constant byte address 0x4 - core index']
  #allocation1 [shape = 'u32[144,128]{1,0:T(1,128)}', space=vmem, size = 0x12000, scoped, tag = 'internal scratch']
  %s0 = inlined_call_operand.vmem [shape: f32[2,3,256], index: 0, kind: input, shape index: {}]
  %s1 = inlined_call_operand.vmem [shape: f32[32,3], index: 1, kind: input, shape index: {}]
  %s2 = inlined_call_operand.vmem [shape: f32[32,1], index: 2, kind: input, shape index: {}]
  %s3 = inlined_call_operand.hbm [shape: f32[2,32,256], index: 3, kind: output, shape index: {}]
  %s4 = sld [smem:[#allocation0]]
  $region45: #{tpu_custom_call.1} parent=0
    _
  %s6 = ssub.s32 1, %s4
  %s7 = scalar_select 0, %s6, %s4
  $region1: #{tpu_custom_call.1} parent=0
    #allocation2 [shape = 'u8[65536]{0}', space=vmem, size = 0x10000, scoped, tag = 'output window, operand 0']
    #allocation3 [shape = 's32[2]{0}', space=sflag, size = 0x8, scoped, tag = 'scoped memory for tpu_custom_call.1']
    %8 = vsyncpa [#allocation3], 0
    %s9 = scalar_lea.sflag [#allocation3], 1
    %10 = vsyncpa %s9, 0
    loop: start=0, step=1, limit=4
    $region2: #{tpu_custom_call.1} parent=1 // loop_pre_header
      _
    $region3: #{tpu_custom_call.1} parent=1 // loop_header
      %s12 = sphi 0, %s16
      %p13 = scmp.ge.s32.totalorder %s12, 4
      %s19 = sphi 0, %s31
      %s20 = sphi 0, %s27
      %s21 = sphi 0, %s19
      %s22 = sphi 0, %s20
      %s23 = sphi 0, %s21
      %s24 = sphi 0, %s22
      %s36 = sphi 0, %s38
      %s39 = sphi 0, %s36
      %s40 = sphi 0, %s39
      %s56 = sphi 0, %s40
      %s60 = sphi 0, %s60
      %s62 = sphi 0, %s60
      %s63 = sphi 0, %s62
      %s77 = sphi 0, %s63
      %s81 = sphi 0, %s81
      %s83 = sphi 0, %s81
      %s84 = sphi 0, %s83
      %s98 = sphi 0, %s84
      %s106 = sphi 0, %s108
      %s109 = sphi 0, %s106
      %s110 = sphi 0, %s109
      %s126 = sphi 0, %s110
    $region4: #{tpu_custom_call.1} parent=1 // loop_header_branch
      %15 = sbr.rel (%p13) target = $region8
    $region5: #{tpu_custom_call.1} parent=1 // loop_body
      %s17 = ssub.s32 %s12, 1
      %s18 = ssub.s32 %s12, 2
      %s25 = sadd.s32 1, %s20
      %p26 = scmp.ge.s32.totalorder %s25, 1
      %s27 = scalar_select %p26, 0, %s25
      %s28 = sadd.s32 1, %s19
      %s29 = scalar_select %p26, %s28, %s19
      %p30 = scmp.ge.s32.totalorder %s29, 2
      %s31 = scalar_select %p30, 0, %s29
      %s32 = ssub.s32 %s19, %s31
      %s33 = ssub.s32 %s20, %s27
      %s34 = sor.u32 %s32, %s33
      %p35 = scmp.eq.s32.totalorder %s34, 0
      %s37 = sadd.s32 %s36, 1
      %s38 = scalar_select %p35, %s36, %s37
      %p41 = pneg %p35
      %p42 = scmp.eq.s32.totalorder %s12, 1
      %p43 = por %p41, %p42
      %p44 = scmp.ne.s32.totalorder %s36, %s39
      %p45 = scmp.eq.s32.totalorder %s12, 0
      %p46 = por %p44, %p45
      %p47 = scmp.ne.s32.totalorder %s36, %s39
      %p48 = scmp.eq.s32.totalorder %s17, 1
      %p49 = por %p47, %p48
      %p50 = scmp.ne.s32.totalorder %s39, %s40
      %p51 = scmp.eq.s32.totalorder %s17, 0
      %p52 = por %p50, %p51
      %p53 = scmp.ne.s32.totalorder %s39, %s40
      %p54 = scmp.eq.s32.totalorder %s18, 1
      %p55 = por %p53, %p54
      %p57 = scmp.ne.s32.totalorder %s40, %s56
      %p58 = scmp.eq.s32.totalorder %s18, 0
      %p59 = por %p57, %p58
      %s61 = sadd.s32 %s60, 1
      %p64 = scmp.eq.s32.totalorder %s12, 1
      %p65 = scmp.ne.s32.totalorder %s60, %s62
      %p66 = scmp.eq.s32.totalorder %s12, 0
      %p67 = por %p65, %p66
      %p68 = scmp.ne.s32.totalorder %s60, %s62
      %p69 = scmp.eq.s32.totalorder %s17, 1
      %p70 = por %p68, %p69
      %p71 = scmp.ne.s32.totalorder %s62, %s63
      %p72 = scmp.eq.s32.totalorder %s17, 0
      %p73 = por %p71, %p72
      %p74 = scmp.ne.s32.totalorder %s62, %s63
      %p75 = scmp.eq.s32.totalorder %s18, 1
      %p76 = por %p74, %p75
      %p78 = scmp.ne.s32.totalorder %s63, %s77
      %p79 = scmp.eq.s32.totalorder %s18, 0
      %p80 = por %p78, %p79
      %s82 = sadd.s32 %s81, 1
      %p85 = scmp.eq.s32.totalorder %s12, 1
      %p86 = scmp.ne.s32.totalorder %s81, %s83
      %p87 = scmp.eq.s32.totalorder %s12, 0
      %p88 = por %p86, %p87
      %p89 = scmp.ne.s32.totalorder %s81, %s83
      %p90 = scmp.eq.s32.totalorder %s17, 1
      %p91 = por %p89, %p90
      %p92 = scmp.ne.s32.totalorder %s83, %s84
      %p93 = scmp.eq.s32.totalorder %s17, 0
      %p94 = por %p92, %p93
      %p95 = scmp.ne.s32.totalorder %s83, %s84
      %p96 = scmp.eq.s32.totalorder %s18, 1
      %p97 = por %p95, %p96
      %p99 = scmp.ne.s32.totalorder %s84, %s98
      %p100 = scmp.eq.s32.totalorder %s18, 0
      %p101 = por %p99, %p100
      %s102 = ssub.s32 %s19, %s31
      %s103 = ssub.s32 %s20, %s27
      %s104 = sor.u32 %s102, %s103
      %p105 = scmp.eq.s32.totalorder %s104, 0
      %s107 = sadd.s32 %s106, 1
      %s108 = scalar_select %p105, %s106, %s107
      %p111 = pneg %p105
      %p112 = scmp.eq.s32.totalorder %s12, 1
      %p113 = por %p111, %p112
      %p114 = scmp.ne.s32.totalorder %s106, %s109
      %p115 = scmp.eq.s32.totalorder %s12, 0
      %p116 = por %p114, %p115
      %p117 = scmp.ne.s32.totalorder %s106, %s109
      %p118 = scmp.eq.s32.totalorder %s17, 1
      %p119 = por %p117, %p118
      %p120 = scmp.ne.s32.totalorder %s109, %s110
      %p121 = scmp.eq.s32.totalorder %s17, 0
      %p122 = por %p120, %p121
      %p123 = scmp.ne.s32.totalorder %s109, %s110
      %p124 = scmp.eq.s32.totalorder %s18, 1
      %p125 = por %p123, %p124
      %p127 = scmp.ne.s32.totalorder %s110, %s126
      %p128 = scmp.eq.s32.totalorder %s18, 0
      %p129 = por %p127, %p128
      %p130 = scmp.le.s32.totalorder 1, %s12
      %p131 = scmp.lt.s32.totalorder %s12, 3
      %p132 = pnand %p130, %p131
      %p133 = pneg %p132
      // Predicated region
      $region9: #{tpu_custom_call.1} parent=5 // pred_check
        _
      $region10: #{tpu_custom_call.1} parent=5 // pred_check_branch
        %135 = sbr.rel (%p132) target = $region12
      $region11: #{tpu_custom_call.1} parent=5 // pred_region
        %s136 = ssub.s32 %s12, 1
        // Predicated region
        $region13: #{tpu_custom_call.1} parent=11 // pred_check
          %p137 = pneg %p73
        $region14: #{tpu_custom_call.1} parent=11 // pred_check_branch
          %139 = sbr.rel (%p137) target = $region16
        $region15: #{tpu_custom_call.1} parent=11 // pred_region
          _
        $region16: #{tpu_custom_call.1} parent=11 // pred_fallthru
          _
        // Predicated region
        $region17: #{tpu_custom_call.1} parent=11 // pred_check
          %p140 = pneg %p94
        $region18: #{tpu_custom_call.1} parent=11 // pred_check_branch
          %142 = sbr.rel (%p140) target = $region20
        $region19: #{tpu_custom_call.1} parent=11 // pred_region
          _
        $region20: #{tpu_custom_call.1} parent=11 // pred_fallthru
          _
      $region12: #{tpu_custom_call.1} parent=5 // pred_fallthru
        _
      %p143 = scmp.lt.s32.totalorder %s12, 2
      // Predicated region
      $region21: #{tpu_custom_call.1} parent=5 // pred_check
        %p144 = pneg %p143
      $region22: #{tpu_custom_call.1} parent=5 // pred_check_branch
        %146 = sbr.rel (%p144) target = $region24
      $region23: #{tpu_custom_call.1} parent=5 // pred_region
        // Predicated region
        $region25: #{tpu_custom_call.1} parent=23 // pred_check
          %p147 = pneg %p46
        $region26: #{tpu_custom_call.1} parent=23 // pred_check_branch
          %149 = sbr.rel (%p147) target = $region28
        $region27: #{tpu_custom_call.1} parent=23 // pred_region
          %s150 = smul.u32 2, %s20
          %p151 = scmp.lt.s32.totalorder %s19, 1
          %s152 = scalar_select %p151, %s19, 1
          %p153 = scmp.lt.s32.totalorder %s150, 1
          %s154 = scalar_select %p153, %s150, 1
          %s155 = smul.addr %s152, 2
          %s156 = sadd.s32 %s154, %s155
          %s157 = smul.addr %s156, 4
          %s158 = scalar_lea.vmem %s0, %s157
          %s159 = smul.u32 2, %s20
        $region28: #{tpu_custom_call.1} parent=23 // pred_fallthru
          _
      $region24: #{tpu_custom_call.1} parent=5 // pred_fallthru
        _
      %p160 = scmp.le.s32.totalorder 1, %s12
      %p161 = scmp.lt.s32.totalorder %s12, 3
      %p162 = pnand %p160, %p161
      %p163 = pneg %p162
      // Predicated region
      $region29: #{tpu_custom_call.1} parent=5 // pred_check
        _
      $region30: #{tpu_custom_call.1} parent=5 // pred_check_branch
        %165 = sbr.rel (%p162) target = $region32
      $region31: #{tpu_custom_call.1} parent=5 // pred_region
        %s166 = ssub.s32 %s12, 1
        %s167 = smul.u32 2, %s22
        %p168 = scmp.lt.s32.totalorder %s21, 1
        %s169 = scalar_select %p168, %s21, 1
        %p170 = scmp.lt.s32.totalorder %s167, 1
        %s171 = scalar_select %p170, %s167, 1
        %s172 = smul.addr %s169, 2
        %s173 = sadd.s32 %s171, %s172
        %s174 = smul.addr %s173, 4
        %s175 = scalar_lea.vmem %s0, %s174
        %p176 = pneg %p52
        %p177 = pneg %p49
        %p178 = pneg %p73
        %p179 = pneg %p70
        %p180 = pneg %p94
        %p181 = pneg %p91
        %p182 = pneg %p122
        %p183 = pneg %p119
        %s184 = sand.u32 %s109, 1
        %s185 = scalar_lea.sflag [#allocation3], %s184
        %s186 = sand.u32 %s109, 1
        %s187 = smul.addr %s186, 64
        %s188 = scalar_lea.vmem [#allocation2], %s187
        %s189 = smul.u32 2, %s22
        %p190 = scmp.lt.s32.totalorder %s21, 1
        %s191 = scalar_select %p190, %s21, 1
        %p192 = scmp.lt.s32.totalorder %s189, 1
        %s193 = scalar_select %p192, %s189, 1
        %s194 = smul.addr %s191, 2
        %s195 = sadd.s32 %s193, %s194
        %s196 = smul.addr %s195, 4
        %s197 = scalar_lea.vmem %s0, %s196
        %s198 = smul.u32 2, %s22
        %s199 = smul.u32 2, %s22
        %v200 = vld [vmem:[%s197] sm:$0x77]
        %v201 = vld [vmem:[%s1] sm:$0xff]
        %v202 = vld [vmem:[%s1 + $0x8] sm:$0xff]
        %v203 = vld [vmem:[%s1 + $0x10] sm:$0xff]
        %v204 = vld [vmem:[%s1 + $0x18] sm:$0xff]
        %v205 = vld [vmem:[%s2] sm:$0xff]
        %v206 = vld [vmem:[%s2 + $0x8] sm:$0xff]
        %v207 = vld [vmem:[%s2 + $0x10] sm:$0xff]
        %v208 = vld [vmem:[%s2 + $0x18] sm:$0xff]
        %210 = vset.pattern.permute.xlu0 0
        %211 = vperm.xlu0 %210, %v205
        %v212 = vpop.permute.xlu0 %211
        %215 = vset.pattern.permute.xlu0 0
        %216 = vperm.xlu0 %215, %v206
        %v217 = vpop.permute.xlu0 %216
        %220 = vset.pattern.permute.xlu0 0
        %221 = vperm.xlu0 %220, %v207
        %v222 = vpop.permute.xlu0 %221
        %225 = vset.pattern.permute.xlu0 0
        %226 = vperm.xlu0 %225, %v208
        %v227 = vpop.permute.xlu0 %226
        %v230 = vcombine.high %v200, %v200
        %vm231 = vcmask 23552
        %v233 = vsel %vm231, %v201, 0
        %v236 = vsel %vm231, %v202, 0
        %v239 = vsel %vm231, %v203, 0
        %v242 = vsel %vm231, %v204, 0
        %vm244 = vcmask 1042432
        %v245 = vsel %vm244, %v200, 0
        %v247 = vsel %vm244, %v230, 0
        %249 = vmatprep.subr.mxu0 0.0
        %250 = vmatpush1.msra.mxu0 0.0
        %251 = vmatprep.subr.mxu0 0.0
        %252 = vmatpush1.msra.mxu0 0.0
        %253 = vmatprep.subr.mxu0 0.0
        %254 = vmatpush1.msra.mxu0 0.0
        %255 = vmatprep.subr.mxu0 0.0
        %256 = vmatpush1.msra.mxu0 0.0
        %257 = vmatprep.subr.mxu0 0.0
        %258 = vmatpush1.msra.mxu0 0.0
        %259 = vmatprep.subr.mxu0 0.0
        %260 = vmatpush1.msra.mxu0 0.0
        %261 = vmatprep.subr.mxu0 0.0
        %262 = vmatpush1.msra.mxu0 0.0
        %263 = vmatprep.subr.mxu0 0.0
        %264 = vmatpush1.msra.mxu0 0.0
        %265 = vmatprep.subr.mxu0 0.0
        %266 = vmatpush1.msra.mxu0 0.0
        %267 = vmatprep.subr.mxu0 0.0
        %268 = vmatpush1.msra.mxu0 0.0
        %269 = vmatprep.subr.mxu0 0.0
        %270 = vmatpush1.msra.mxu0 0.0
        %271 = vmatprep.subr.mxu0 0.0
        %272 = vmatpush1.msra.mxu0 0.0
        %273 = vmatprep.subr.mxu0 0.0
        %274 = vmatpush1.msra.mxu0 0.0
        %275 = vmatprep.subr.mxu0 0.0
        %276 = vmatpush1.msra.mxu0 0.0
        %277 = vmatprep.subr.mxu0 0.0
        %278 = vmatpush1.msra.mxu0 0.0
        %279 = vmatprep.subr.mxu0 %v247
        %280 = vmatpush1.msra.mxu0 %v245
        %281 = vmatprep.subr.mxu0 0.0
        %282 = vmatpush2.msra.mxu0 0.0
        %283 = vmatprep.subr.mxu0 0.0
        %284 = vmatpush2.msra.mxu0 0.0
        %285 = vmatprep.subr.mxu0 0.0
        %286 = vmatpush2.msra.mxu0 0.0
        %287 = vmatprep.subr.mxu0 0.0
        %288 = vmatpush2.msra.mxu0 0.0
        %289 = vmatprep.subr.mxu0 0.0
        %290 = vmatpush2.msra.mxu0 0.0
        %291 = vmatprep.subr.mxu0 0.0
        %292 = vmatpush2.msra.mxu0 0.0
        %293 = vmatprep.subr.mxu0 0.0
        %294 = vmatpush2.msra.mxu0 0.0
        %295 = vmatprep.subr.mxu0 0.0
        %296 = vmatpush2.msra.mxu0 0.0
        %297 = vmatprep.subr.mxu0 0.0
        %298 = vmatpush2.msra.mxu0 0.0
        %299 = vmatprep.subr.mxu0 0.0
        %300 = vmatpush2.msra.mxu0 0.0
        %301 = vmatprep.subr.mxu0 0.0
        %302 = vmatpush2.msra.mxu0 0.0
        %303 = vmatprep.subr.mxu0 0.0
        %304 = vmatpush2.msra.mxu0 0.0
        %305 = vmatprep.subr.mxu0 0.0
        %306 = vmatpush2.msra.mxu0 0.0
        %307 = vmatprep.subr.mxu0 0.0
        %308 = vmatpush2.msra.mxu0 0.0
        %309 = vmatprep.subr.mxu0 0.0
        %310 = vmatpush2.msra.mxu0 0.0
        %311 = vmatprep.subr.mxu0 0.0
        %312 = vmatpush2.msra.mxu0 0.0
        %313 = vmatprep.mubr.f32.mxu0 0.0
        %314 = vmatmul.mubr.f32.gmra.mxu0 %v233
        %v315 = vpop.f32.mrf.mxu0
        %v316 = vadd.f32 %v212, %v315
        %v317 = vpop.f32.mrf.mxu0
        %v318 = vadd.f32 %v212, %v317
        %319 = vmatprep.mubr.f32.mxu0 0.0
        %320 = vmatmul.mubr.f32.gmra.mxu0 %v236
        %v321 = vpop.f32.mrf.mxu0
        %v322 = vadd.f32 %v217, %v321
        %v323 = vpop.f32.mrf.mxu0
        %v324 = vadd.f32 %v217, %v323
        %325 = vmatprep.mubr.f32.mxu0 0.0
        %326 = vmatmul.mubr.f32.gmra.mxu0 %v239
        %v327 = vpop.f32.mrf.mxu0
        %v328 = vadd.f32 %v222, %v327
        %v329 = vpop.f32.mrf.mxu0
        %v330 = vadd.f32 %v222, %v329
        %331 = vmatprep.mubr.f32.mxu0 0.0
        %332 = vmatmul.mubr.f32.gmra.mxu0 %v242
        %v333 = vpop.f32.mrf.mxu0
        %v334 = vadd.f32 %v227, %v333
        %v335 = vpop.f32.mrf.mxu0
        %v336 = vadd.f32 %v227, %v335
        %337 = vdwg.mxu0
        %v338 = vmul.f32 %v316, 0.5
        %v339 = vmul.f32 %v318, 0.5
        %v340 = vmul.f32 %v322, 0.5
        %v341 = vmul.f32 %v324, 0.5
        %v342 = vmul.f32 %v328, 0.5
        %v343 = vmul.f32 %v330, 0.5
        %v344 = vmul.f32 %v334, 0.5
        %v345 = vmul.f32 %v336, 0.5
        %v346 = vmul.f32 %v316, 0.70710677
        %v347 = vmul.f32 %v318, 0.70710677
        %v348 = vmul.f32 %v322, 0.70710677
        %v349 = vmul.f32 %v324, 0.70710677
        %v350 = vmul.f32 %v328, 0.70710677
        %v351 = vmul.f32 %v330, 0.70710677
        %v352 = vmul.f32 %v334, 0.70710677
        %v353 = vmul.f32 %v336, 0.70710677
        %v354 = verf.f32.pop %v346
        %v355 = verf.f32.pop %v347
        %v356 = verf.f32.pop %v348
        %v357 = verf.f32.pop %v349
        %v358 = verf.f32.pop %v350
        %v359 = verf.f32.pop %v351
        %v360 = verf.f32.pop %v352
        %v361 = verf.f32.pop %v353
        %v362 = vadd.f32 %v354, 1.0
        %v363 = vadd.f32 %v355, 1.0
        %v364 = vadd.f32 %v356, 1.0
        %v365 = vadd.f32 %v357, 1.0
        %v366 = vadd.f32 %v358, 1.0
        %v367 = vadd.f32 %v359, 1.0
        %v368 = vadd.f32 %v360, 1.0
        %v369 = vadd.f32 %v361, 1.0
        %v370 = vmul.f32 %v338, %v362
        %v371 = vmul.f32 %v339, %v363
        %v372 = vmul.f32 %v340, %v364
        %v373 = vmul.f32 %v341, %v365
        %v374 = vmul.f32 %v342, %v366
        %v375 = vmul.f32 %v343, %v367
        %v376 = vmul.f32 %v344, %v368
        %v377 = vmul.f32 %v345, %v369
        %378 = vst [vmem:[%s188] sm:$0xff] %v370
        %379 = vst [vmem:[%s188 + $0x8] sm:$0xff] %v371
        %380 = vst [vmem:[%s188 + $0x10] sm:$0xff] %v372
        %381 = vst [vmem:[%s188 + $0x18] sm:$0xff] %v373
        %382 = vst [vmem:[%s188 + $0x20] sm:$0xff] %v374
        %383 = vst [vmem:[%s188 + $0x28] sm:$0xff] %v375
        %384 = vst [vmem:[%s188 + $0x30] sm:$0xff] %v376
        %385 = vst [vmem:[%s188 + $0x38] sm:$0xff] %v377
        %s386 = sand.u32 %s109, 1
        %s387 = scalar_lea.sflag [#allocation3], %s386
        %s388 = sand.u32 %s109, 1
        %s389 = smul.addr %s388, 64
        %s390 = scalar_lea.vmem [#allocation2], %s389
        // Predicated region
        $region33: #{tpu_custom_call.1} parent=31 // pred_check
          %p391 = pneg %p119
        $region34: #{tpu_custom_call.1} parent=31 // pred_check_branch
          %393 = sbr.rel (%p391) target = $region36
        $region35: #{tpu_custom_call.1} parent=31 // pred_region
          %s394 = smul.u32 2, %s22
          %s396 = ssub.s32 1024, 1024
          %397 = vsyncadd %s387, %s396
          %s398 = smul.addr %s21, 8
          %s399 = sadd.s32 %s394, %s398
          %s400 = smul.addr %s399, 128
          %s401 = scalar_lea.hbm %s3, %s400
          %s402 = sshll.u32 %s390, 4
          %s403 = int_to_ptr.vmem [resolvable:$true] %s402
          %408 = dma.vmem_to_hbm [thread:$0]  %s403, 1024, %s401, %s387, 256, 256, 16
        $region36: #{tpu_custom_call.1} parent=31 // pred_fallthru
          _
      $region32: #{tpu_custom_call.1} parent=5 // pred_fallthru
        _
      %p409 = scmp.le.s32.totalorder 2, %s12
      // Predicated region
      $region37: #{tpu_custom_call.1} parent=5 // pred_check
        %p410 = pneg %p409
      $region38: #{tpu_custom_call.1} parent=5 // pred_check_branch
        %412 = sbr.rel (%p410) target = $region40
      $region39: #{tpu_custom_call.1} parent=5 // pred_region
        %s413 = ssub.s32 %s12, 2
        // Predicated region
        $region41: #{tpu_custom_call.1} parent=39 // pred_check
          %p414 = pneg %p125
        $region42: #{tpu_custom_call.1} parent=39 // pred_check_branch
          %416 = sbr.rel (%p414) target = $region44
        $region43: #{tpu_custom_call.1} parent=39 // pred_region
          %s417 = sand.u32 %s110, 1
          %s418 = scalar_lea.sflag [#allocation3], %s417
          %s419 = sand.u32 %s110, 1
          %s420 = smul.addr %s419, 64
          %s421 = scalar_lea.vmem [#allocation2], %s420
          %422 = dma.done %s418, 1024
        $region44: #{tpu_custom_call.1} parent=39 // pred_fallthru
          _
      $region40: #{tpu_custom_call.1} parent=5 // pred_fallthru
        _
    $region6: #{tpu_custom_call.1} parent=1 // loop_footer
      %s16 = sadd.s32 1, %s12
    $region7: #{tpu_custom_call.1} parent=1 // loop_footer_branch
      %11 = sbr.rel target = $region3
    $region8: #{tpu_custom_call.1} parent=1 // loop_exit
      _
    %423 = vsyncpa [#allocation3], 1
    %s424 = scalar_lea.sflag [#allocation3], 1
    %425 = vsyncpa %s424, 1

</llo_original>
